<compile_context>
chip_gen: v6e
topology: v6e:2x2x1
jax: 0.10.0
libtpu: 0.0.40
codegen_flags: <defaults>
</compile_context>

<pallas_src>
import functools

import jax
import jax.numpy as jnp
from jax.experimental import pallas as pl
from jax.experimental.pallas import tpu as pltpu


def _chip_kind():
    """Best-effort TPU generation string (lowercase, empty if unknown)."""
    try:
        return jax.devices()[0].device_kind.lower()
    except Exception:  # pragma: no cover - defensive only
        return ""


def _fused_mlp_kernel(x_ref, *refs, dot_dtype):
    """Whole network forward on one batch tile; weights resident in VMEM.

    refs = (w_0, b_0, w_1, b_1, ..., w_{L-1}, b_{L-1}, o_ref).
    Weights are already stored in `dot_dtype` (bf16 on v6e/v7x, f32 otherwise);
    biases and the softmax epilogue stay f32.
    """
    o_ref = refs[-1]
    wb_refs = refs[:-1]
    n_layers = len(wb_refs) // 2

    h = x_ref[...].astype(jnp.float32)
    # Static unroll: tiny, compile-time-known layer count with differing shapes.
    for l in range(n_layers):
        w = wb_refs[2 * l][...]                                # (Din, Dout), dot_dtype
        b = wb_refs[2 * l + 1][...].astype(jnp.float32)        # (1, Dout), sublane bcast
        # MXU matmul with f32 accumulation (bf16 inputs on v6e/v7x), + bias on VPU.
        y = jnp.dot(h.astype(dot_dtype), w,
                    preferred_element_type=jnp.float32) + b
        # Numerically-stable softmax along the feature (lane) axis, in f32.
        m = jnp.max(y, axis=-1, keepdims=True)
        e = jnp.exp(y - m)
        denom = jnp.sum(e, axis=-1, keepdims=True)
        if l == n_layers - 1:
            # Exact divide on the final layer: approx-recip error must not land
            # in the returned probabilities.
            h = e / denom
        else:
            # EUP approx reciprocal (free slot) for the hidden layers.
            h = e * pl.reciprocal(denom, approx=True)
    o_ref[...] = h.astype(o_ref.dtype)


def neural_net_forward(params, x):
    """softmax-MLP forward, fused into a single Pallas call (batch-only tiling).

    params: list of (w, b) with w: (Din_l, Dout_l) f32, b: (1, Dout_l) f32
    x:      (B, Din_0) f32
    """
    B, Din = x.shape
    Dout = params[-1][0].shape[1]

    kind = _chip_kind()
    is_v7 = "v7" in kind
    use_bf16_mxu = ("v6" in kind) or is_v7       # v5e keeps f32 (no bf16 VPU/EUP)
    dot_dtype = jnp.bfloat16 if use_bf16_mxu else jnp.float32

    # --- Batch tiling ------------------------------------------------------
    # Tiles up to 512 rows (multiple of 8 => (8,128) rule satisfied); VMEM cost
    # is trivial at these feature widths. No padding: Pallas masks the partial
    # last block; garbage rows are row-local under softmax and never stored.
    TB_MAX = 512
    B8 = -(-B // 8) * 8                          # B rounded up to f32 sublane
    TB = min(B8, TB_MAX)
    if is_v7 and B8 >= 16 and pl.cdiv(B, TB) < 2:
        # v7x has 2 TensorCores: guarantee >=2 independent "parallel" tiles.
        TB = -(-(B8 // 2) // 8) * 8
    n_tiles = pl.cdiv(B, TB)

    # --- Specs --------------------------------------------------------------
    in_specs = [pl.BlockSpec((TB, Din), lambda i: (i, 0))]
    flat_wb = []
    for (w, b) in params:
        din, dout = w.shape
        # Constant index_maps: weights/biases stay VMEM-resident across tiles.
        in_specs.append(pl.BlockSpec((din, dout), lambda i: (0, 0)))
        in_specs.append(pl.BlockSpec((1, dout), lambda i: (0, 0)))
        flat_wb += [w.astype(dot_dtype), b]      # pre-cast weights once (wrapper)

    # --- Advisory cost estimate ---------------------------------------------
    matmul_flops = 2 * B * sum(w.shape[0] * w.shape[1] for (w, _) in params)
    transcendentals = B * sum(w.shape[1] for (w, _) in params) + B * len(params)
    bytes_accessed = 4 * (B * Din + B * Dout) + sum(
        w.size * w.dtype.itemsize + 4 * b.size for (w, b) in params)
    cost = pl.CostEstimate(flops=matmul_flops,
                           transcendentals=transcendentals,
                           bytes_accessed=bytes_accessed)

    out = pl.pallas_call(
        functools.partial(_fused_mlp_kernel, dot_dtype=dot_dtype),
        out_shape=jax.ShapeDtypeStruct((B, Dout), x.dtype),
        grid=(n_tiles,),
        in_specs=in_specs,
        out_specs=pl.BlockSpec((TB, Dout), lambda i: (i, 0)),
        compiler_params=pltpu.CompilerParams(
            # Batch tiles are independent -> shard across TCs on v7x megacore.
            dimension_semantics=("parallel",),
        ),
        cost_estimate=cost,
    )(x, *flat_wb)
    return out


neural_net_forward_jit = jax.jit(neural_net_forward)


def init_params(key, no_inputs, no_capas, no_neuronas, no_output):
    """Deterministic init mimicking nn.Linear's U(-1/sqrt(fan_in), 1/sqrt(fan_in)).

    Biases are stored as (1, Dout) so the kernel adds them with a free
    sublane broadcast (no in-kernel reshape of a 1-D ref).
    """
    params = []
    dims = [(no_inputs, no_neuronas)]
    dims += [(no_neuronas, no_neuronas) for _ in range(no_capas)]
    dims += [(no_neuronas, no_output)]
    for (din, dout) in dims:
        key, kw, kb = jax.random.split(key, 3)
        bound = 1.0 / jnp.sqrt(jnp.float32(din))
        w = jax.random.uniform(kw, (din, dout), jnp.float32, -bound, bound)
        b = jax.random.uniform(kb, (1, dout), jnp.float32, -bound, bound)
        params.append((w, b))
    return params


if __name__ == "__main__":
    # Shapes consistent with the module: NeuralNet(noInputs=16, noCapas=2,
    # noNeuronas=32, noOutput=8), batch=2.
    no_inputs, no_capas, no_neuronas, no_output = 16, 2, 32, 8
    batch = 2

    key = jax.random.PRNGKey(0)
    key, kx = jax.random.split(key)
    x = jax.random.normal(kx, (batch, no_inputs), jnp.float32)

    params = init_params(key, no_inputs, no_capas, no_neuronas, no_output)

    out = neural_net_forward_jit(params, x)
    out = jax.block_until_ready(out)

    # Sanity checks: shape and softmax rows summing to 1 (final layer uses an
    # exact divide, so this is tight).
    assert out.shape == (batch, no_output)
    row_sums = jnp.sum(out, axis=1)
    assert bool(jnp.all(jnp.abs(row_sums - 1.0) < 1e-3))

    # Cross-check against a pure-JAX f32 reference. Tolerance depends on the
    # MXU input dtype chosen for this chip generation (bf16 on v6e/v7x).
    def ref_forward(params, x):
        h = x
        for (w, b) in params:
            h = jax.nn.softmax(h @ w + b, axis=1)
        return h

    ref = ref_forward(params, x)
    tol = 2e-2 if ("v6" in _chip_kind() or "v7" in _chip_kind()) else 2e-3
    assert bool(jnp.all(jnp.abs(out - ref) < tol))

    print("KERNEL_OK")
</pallas_src>

<mosaic_0001>
module attributes {stable_mosaic.version = 11 : i64} {
  func.func @_fused_mlp_kernel(%arg0: i32, %arg1: memref<8x16xf32, #tpu.memory_space<vmem>>, %arg2: memref<16x32xf32, #tpu.memory_space<vmem>>, %arg3: memref<1x32xf32, #tpu.memory_space<vmem>>, %arg4: memref<32x32xf32, #tpu.memory_space<vmem>>, %arg5: memref<1x32xf32, #tpu.memory_space<vmem>>, %arg6: memref<32x32xf32, #tpu.memory_space<vmem>>, %arg7: memref<1x32xf32, #tpu.memory_space<vmem>>, %arg8: memref<32x8xf32, #tpu.memory_space<vmem>>, %arg9: memref<1x8xf32, #tpu.memory_space<vmem>>, %arg10: memref<8x8xf32, #tpu.memory_space<vmem>>) attributes {dimension_semantics = [#tpu.dimension_semantics<parallel>], iteration_bounds = array<i64: 1>, scalar_prefetch = 0 : i64, scratch_operands = 0 : i64, tpu.core_type = #tpu.core_type<tc>, window_params = [{transform_indices = @transform_0, window_bounds = array<i64: 8, 16>}, {pipeline_mode = #tpu.pipeline_mode<synchronous>, transform_indices = @transform_1, window_bounds = array<i64: 16, 32>}, {pipeline_mode = #tpu.pipeline_mode<synchronous>, transform_indices = @transform_2, window_bounds = array<i64: 1, 32>}, {pipeline_mode = #tpu.pipeline_mode<synchronous>, transform_indices = @transform_3, window_bounds = array<i64: 32, 32>}, {pipeline_mode = #tpu.pipeline_mode<synchronous>, transform_indices = @transform_4, window_bounds = array<i64: 1, 32>}, {pipeline_mode = #tpu.pipeline_mode<synchronous>, transform_indices = @transform_5, window_bounds = array<i64: 32, 32>}, {pipeline_mode = #tpu.pipeline_mode<synchronous>, transform_indices = @transform_6, window_bounds = array<i64: 1, 32>}, {pipeline_mode = #tpu.pipeline_mode<synchronous>, transform_indices = @transform_7, window_bounds = array<i64: 32, 8>}, {pipeline_mode = #tpu.pipeline_mode<synchronous>, transform_indices = @transform_8, window_bounds = array<i64: 1, 8>}, {transform_indices = @transform_9, window_bounds = array<i64: 8, 8>}]} {
    %c0 = arith.constant 0 : index
    %c0_0 = arith.constant 0 : index
    %0 = vector.load %arg1[%c0, %c0_0] : memref<8x16xf32, #tpu.memory_space<vmem>>, vector<8x16xf32>
    %c0_1 = arith.constant 0 : index
    %c0_2 = arith.constant 0 : index
    %1 = vector.load %arg2[%c0_1, %c0_2] : memref<16x32xf32, #tpu.memory_space<vmem>>, vector<16x32xf32>
    %c0_3 = arith.constant 0 : index
    %c0_4 = arith.constant 0 : index
    %2 = vector.load %arg3[%c0_3, %c0_4] : memref<1x32xf32, #tpu.memory_space<vmem>>, vector<1x32xf32>
    %cst = arith.constant dense<0.000000e+00> : vector<8x32xf32>
    %3 = tpu.matmul %0, %1, %cst {dimension_numbers = #tpu.dot_dimension_numbers<[1], [0], [0], [1], [0, 0, 1, 1], [], []>} : vector<8x16xf32>, vector<16x32xf32>, vector<8x32xf32> -> vector<8x32xf32>
    %4 = vector.broadcast %2 : vector<1x32xf32> to vector<8x32xf32>
    %5 = arith.addf %3, %4 : vector<8x32xf32>
    %cst_5 = arith.constant dense<0xFF800000> : vector<8xf32>
    %6 = vector.multi_reduction <maximumf>, %5, %cst_5 [1] : vector<8x32xf32> to vector<8xf32>
    %7 = vector.shape_cast %6 : vector<8xf32> to vector<8x1xf32>
    %8 = vector.broadcast %7 : vector<8x1xf32> to vector<8x32xf32>
    %9 = arith.subf %5, %8 : vector<8x32xf32>
    %10 = math.exp %9 : vector<8x32xf32>
    %cst_6 = arith.constant dense<0.000000e+00> : vector<8xf32>
    %11 = vector.multi_reduction <add>, %10, %cst_6 [1] : vector<8x32xf32> to vector<8xf32>
    %12 = vector.shape_cast %11 : vector<8xf32> to vector<8x1xf32>
    %13 = tpu.reciprocal %12 {approx = true} : vector<8x1xf32> -> vector<8x1xf32>
    %14 = vector.broadcast %13 : vector<8x1xf32> to vector<8x32xf32>
    %15 = arith.mulf %10, %14 : vector<8x32xf32>
    %c0_7 = arith.constant 0 : index
    %c0_8 = arith.constant 0 : index
    %16 = vector.load %arg4[%c0_7, %c0_8] : memref<32x32xf32, #tpu.memory_space<vmem>>, vector<32x32xf32>
    %c0_9 = arith.constant 0 : index
    %c0_10 = arith.constant 0 : index
    %17 = vector.load %arg5[%c0_9, %c0_10] : memref<1x32xf32, #tpu.memory_space<vmem>>, vector<1x32xf32>
    %cst_11 = arith.constant dense<0.000000e+00> : vector<8x32xf32>
    %18 = tpu.matmul %15, %16, %cst_11 {dimension_numbers = #tpu.dot_dimension_numbers<[1], [0], [0], [1], [0, 0, 1, 1], [], []>} : vector<8x32xf32>, vector<32x32xf32>, vector<8x32xf32> -> vector<8x32xf32>
    %19 = vector.broadcast %17 : vector<1x32xf32> to vector<8x32xf32>
    %20 = arith.addf %18, %19 : vector<8x32xf32>
    %cst_12 = arith.constant dense<0xFF800000> : vector<8xf32>
    %21 = vector.multi_reduction <maximumf>, %20, %cst_12 [1] : vector<8x32xf32> to vector<8xf32>
    %22 = vector.shape_cast %21 : vector<8xf32> to vector<8x1xf32>
    %23 = vector.broadcast %22 : vector<8x1xf32> to vector<8x32xf32>
    %24 = arith.subf %20, %23 : vector<8x32xf32>
    %25 = math.exp %24 : vector<8x32xf32>
    %cst_13 = arith.constant dense<0.000000e+00> : vector<8xf32>
    %26 = vector.multi_reduction <add>, %25, %cst_13 [1] : vector<8x32xf32> to vector<8xf32>
    %27 = vector.shape_cast %26 : vector<8xf32> to vector<8x1xf32>
    %28 = tpu.reciprocal %27 {approx = true} : vector<8x1xf32> -> vector<8x1xf32>
    %29 = vector.broadcast %28 : vector<8x1xf32> to vector<8x32xf32>
    %30 = arith.mulf %25, %29 : vector<8x32xf32>
    %c0_14 = arith.constant 0 : index
    %c0_15 = arith.constant 0 : index
    %31 = vector.load %arg6[%c0_14, %c0_15] : memref<32x32xf32, #tpu.memory_space<vmem>>, vector<32x32xf32>
    %c0_16 = arith.constant 0 : index
    %c0_17 = arith.constant 0 : index
    %32 = vector.load %arg7[%c0_16, %c0_17] : memref<1x32xf32, #tpu.memory_space<vmem>>, vector<1x32xf32>
    %cst_18 = arith.constant dense<0.000000e+00> : vector<8x32xf32>
    %33 = tpu.matmul %30, %31, %cst_18 {dimension_numbers = #tpu.dot_dimension_numbers<[1], [0], [0], [1], [0, 0, 1, 1], [], []>} : vector<8x32xf32>, vector<32x32xf32>, vector<8x32xf32> -> vector<8x32xf32>
    %34 = vector.broadcast %32 : vector<1x32xf32> to vector<8x32xf32>
    %35 = arith.addf %33, %34 : vector<8x32xf32>
    %cst_19 = arith.constant dense<0xFF800000> : vector<8xf32>
    %36 = vector.multi_reduction <maximumf>, %35, %cst_19 [1] : vector<8x32xf32> to vector<8xf32>
    %37 = vector.shape_cast %36 : vector<8xf32> to vector<8x1xf32>
    %38 = vector.broadcast %37 : vector<8x1xf32> to vector<8x32xf32>
    %39 = arith.subf %35, %38 : vector<8x32xf32>
    %40 = math.exp %39 : vector<8x32xf32>
    %cst_20 = arith.constant dense<0.000000e+00> : vector<8xf32>
    %41 = vector.multi_reduction <add>, %40, %cst_20 [1] : vector<8x32xf32> to vector<8xf32>
    %42 = vector.shape_cast %41 : vector<8xf32> to vector<8x1xf32>
    %43 = tpu.reciprocal %42 {approx = true} : vector<8x1xf32> -> vector<8x1xf32>
    %44 = vector.broadcast %43 : vector<8x1xf32> to vector<8x32xf32>
    %45 = arith.mulf %40, %44 : vector<8x32xf32>
    %c0_21 = arith.constant 0 : index
    %c0_22 = arith.constant 0 : index
    %46 = vector.load %arg8[%c0_21, %c0_22] : memref<32x8xf32, #tpu.memory_space<vmem>>, vector<32x8xf32>
    %c0_23 = arith.constant 0 : index
    %c0_24 = arith.constant 0 : index
    %47 = vector.load %arg9[%c0_23, %c0_24] : memref<1x8xf32, #tpu.memory_space<vmem>>, vector<1x8xf32>
    %cst_25 = arith.constant dense<0.000000e+00> : vector<8x8xf32>
    %48 = tpu.matmul %45, %46, %cst_25 {dimension_numbers = #tpu.dot_dimension_numbers<[1], [0], [0], [1], [0, 0, 1, 1], [], []>} : vector<8x32xf32>, vector<32x8xf32>, vector<8x8xf32> -> vector<8x8xf32>
    %49 = vector.broadcast %47 : vector<1x8xf32> to vector<8x8xf32>
    %50 = arith.addf %48, %49 : vector<8x8xf32>
    %cst_26 = arith.constant dense<0xFF800000> : vector<8xf32>
    %51 = vector.multi_reduction <maximumf>, %50, %cst_26 [1] : vector<8x8xf32> to vector<8xf32>
    %52 = vector.shape_cast %51 : vector<8xf32> to vector<8x1xf32>
    %53 = vector.broadcast %52 : vector<8x1xf32> to vector<8x8xf32>
    %54 = arith.subf %50, %53 : vector<8x8xf32>
    %55 = math.exp %54 : vector<8x8xf32>
    %cst_27 = arith.constant dense<0.000000e+00> : vector<8xf32>
    %56 = vector.multi_reduction <add>, %55, %cst_27 [1] : vector<8x8xf32> to vector<8xf32>
    %57 = vector.shape_cast %56 : vector<8xf32> to vector<8x1xf32>
    %58 = vector.broadcast %57 : vector<8x1xf32> to vector<8x8xf32>
    %59 = arith.divf %55, %58 : vector<8x8xf32>
    %c0_28 = arith.constant 0 : index
    %c0_29 = arith.constant 0 : index
    %60 = vector.load %arg10[%c0_28, %c0_29] : memref<8x8xf32, #tpu.memory_space<vmem>>, vector<8x8xf32>
    tpu.vector_store %arg10[%c0_28, %c0_29], %59 {strides = array<i32>} : memref<8x8xf32, #tpu.memory_space<vmem>>, vector<8x8xf32>,
    return
  }
  func.func @transform_0(%arg0: i32) -> (i32, i32) {
    %c0_i32 = arith.constant 0 : i32
    %c0_i32_0 = arith.constant 0 : i32
    return %arg0, %c0_i32 : i32, i32
  }
  func.func @transform_1(%arg0: i32) -> (i32, i32) {
    %c0_i32 = arith.constant 0 : i32
    %c0_i32_0 = arith.constant 0 : i32
    %c0_i32_1 = arith.constant 0 : i32
    return %c0_i32, %c0_i32_0 : i32, i32
  }
  func.func @transform_2(%arg0: i32) -> (i32, i32) {
    %c0_i32 = arith.constant 0 : i32
    %c0_i32_0 = arith.constant 0 : i32
    %c0_i32_1 = arith.constant 0 : i32
    return %c0_i32, %c0_i32_0 : i32, i32
  }
  func.func @transform_3(%arg0: i32) -> (i32, i32) {
    %c0_i32 = arith.constant 0 : i32
    %c0_i32_0 = arith.constant 0 : i32
    %c0_i32_1 = arith.constant 0 : i32
    return %c0_i32, %c0_i32_0 : i32, i32
  }
  func.func @transform_4(%arg0: i32) -> (i32, i32) {
    %c0_i32 = arith.constant 0 : i32
    %c0_i32_0 = arith.constant 0 : i32
    %c0_i32_1 = arith.constant 0 : i32
    return %c0_i32, %c0_i32_0 : i32, i32
  }
  func.func @transform_5(%arg0: i32) -> (i32, i32) {
    %c0_i32 = arith.constant 0 : i32
    %c0_i32_0 = arith.constant 0 : i32
    %c0_i32_1 = arith.constant 0 : i32
    return %c0_i32, %c0_i32_0 : i32, i32
  }
  func.func @transform_6(%arg0: i32) -> (i32, i32) {
    %c0_i32 = arith.constant 0 : i32
    %c0_i32_0 = arith.constant 0 : i32
    %c0_i32_1 = arith.constant 0 : i32
    return %c0_i32, %c0_i32_0 : i32, i32
  }
  func.func @transform_7(%arg0: i32) -> (i32, i32) {
    %c0_i32 = arith.constant 0 : i32
    %c0_i32_0 = arith.constant 0 : i32
    %c0_i32_1 = arith.constant 0 : i32
    return %c0_i32, %c0_i32_0 : i32, i32
  }
  func.func @transform_8(%arg0: i32) -> (i32, i32) {
    %c0_i32 = arith.constant 0 : i32
    %c0_i32_0 = arith.constant 0 : i32
    %c0_i32_1 = arith.constant 0 : i32
    return %c0_i32, %c0_i32_0 : i32, i32
  }
  func.func @transform_9(%arg0: i32) -> (i32, i32) {
    %c0_i32 = arith.constant 0 : i32
    %c0_i32_0 = arith.constant 0 : i32
    return %arg0, %c0_i32 : i32, i32
  }
}

</mosaic_0001>

<llo_original>
// kernel: neural_net_forward.1
$region0: #{neural_net_forward.1}
  #allocation0 [shape = 'u32[]', space=smem, size = 0x4, offset = 0x4, fixed_abs, tag = 'smem constant byte address 0x4 - core index']
  #allocation1 [shape = 'u32[144,128]{1,0:T(1,128)}', space=vmem, size = 0x12000, scoped, tag = 'internal scratch']
  %s0 = inlined_call_operand.vmem [shape: f32[2,16], index: 0, kind: input, shape index: {}]
  %s1 = inlined_call_operand.hbm [shape: f32[16,32], index: 1, kind: input, shape index: {}]
  %s2 = inlined_call_operand.vmem [shape: f32[1,32], index: 2, kind: input, shape index: {}]
  %s3 = inlined_call_operand.vmem [shape: f32[32,32], index: 3, kind: input, shape index: {}]
  %s4 = inlined_call_operand.vmem [shape: f32[1,32], index: 4, kind: input, shape index: {}]
  %s5 = inlined_call_operand.hbm [shape: f32[32,32], index: 5, kind: input, shape index: {}]
  %s6 = inlined_call_operand.vmem [shape: f32[1,32], index: 6, kind: input, shape index: {}]
  %s7 = inlined_call_operand.vmem [shape: f32[32,8], index: 7, kind: input, shape index: {}]
  %s8 = inlined_call_operand.vmem [shape: f32[1,8], index: 8, kind: input, shape index: {}]
  %s9 = inlined_call_operand.hbm [shape: f32[2,8], index: 9, kind: output, shape index: {}]
  %s10 = sld [smem:[#allocation0]]
  $region54: #{neural_net_forward.1} parent=0
    _
  %s12 = ssub.s32 1, %s10
  %s13 = scalar_select 0, %s12, %s10
  $region1: #{neural_net_forward.1} parent=0
    #allocation2 [shape = 'u8[8192]{0}', space=vmem, size = 0x2000, scoped, tag = 'input window, operand 1, single buffered']
    #allocation3 [shape = 's32[1]{0}', space=sflag, size = 0x4, scoped, tag = 'scoped memory for neural_net_forward.1']
    #allocation4 [shape = 's32[1]{0}', space=sflag, size = 0x4, scoped, tag = 'scoped memory for neural_net_forward.1']
    #allocation5 [shape = 'u8[16384]{0}', space=vmem, size = 0x4000, scoped, tag = 'input window, operand 5, single buffered']
    #allocation6 [shape = 's32[1]{0}', space=sflag, size = 0x4, scoped, tag = 'scoped memory for neural_net_forward.1']
    #allocation7 [shape = 'u8[4096]{0}', space=vmem, size = 0x1000, scoped, tag = 'output window, operand 0, single buffered']
    %14 = vsyncpa [#allocation3], 0
    %15 = vsyncpa [#allocation6], 0
    %16 = vsyncpa [#allocation4], 0
    // Predicated region
    $region2: #{neural_net_forward.1} parent=1 // pred_check
      _
    $region3: #{neural_net_forward.1} parent=1 // pred_check_branch
      %18 = sbr.rel (0) target = $region5
    $region4: #{neural_net_forward.1} parent=1 // pred_region
      _
    $region5: #{neural_net_forward.1} parent=1 // pred_fallthru
      _
    // Predicated region
    $region6: #{neural_net_forward.1} parent=1 // pred_check
      _
    $region7: #{neural_net_forward.1} parent=1 // pred_check_branch
      %20 = sbr.rel (0) target = $region9
    $region8: #{neural_net_forward.1} parent=1 // pred_region
      %s22 = ssub.s32 256, 256
      %23 = vsyncadd [#allocation3], %s22
      %s24 = sshll.u32 [#allocation2], 4
      %s25 = int_to_ptr.vmem [resolvable:$true] %s24
      %30 = dma.hbm_to_vmem [thread:$0]  %s1, 256, %s25, [#allocation3], 128, 128, 8
    $region9: #{neural_net_forward.1} parent=1 // pred_fallthru
      _
    // Predicated region
    $region10: #{neural_net_forward.1} parent=1 // pred_check
      _
    $region11: #{neural_net_forward.1} parent=1 // pred_check_branch
      %32 = sbr.rel (0) target = $region13
    $region12: #{neural_net_forward.1} parent=1 // pred_region
      _
    $region13: #{neural_net_forward.1} parent=1 // pred_fallthru
      _
    // Predicated region
    $region14: #{neural_net_forward.1} parent=1 // pred_check
      _
    $region15: #{neural_net_forward.1} parent=1 // pred_check_branch
      %34 = sbr.rel (0) target = $region17
    $region16: #{neural_net_forward.1} parent=1 // pred_region
      _
    $region17: #{neural_net_forward.1} parent=1 // pred_fallthru
      _
    // Predicated region
    $region18: #{neural_net_forward.1} parent=1 // pred_check
      _
    $region19: #{neural_net_forward.1} parent=1 // pred_check_branch
      %36 = sbr.rel (0) target = $region21
    $region20: #{neural_net_forward.1} parent=1 // pred_region
      _
    $region21: #{neural_net_forward.1} parent=1 // pred_fallthru
      _
    // Predicated region
    $region22: #{neural_net_forward.1} parent=1 // pred_check
      _
    $region23: #{neural_net_forward.1} parent=1 // pred_check_branch
      %38 = sbr.rel (0) target = $region25
    $region24: #{neural_net_forward.1} parent=1 // pred_region
      %s40 = ssub.s32 512, 512
      %41 = vsyncadd [#allocation6], %s40
      %s42 = sshll.u32 [#allocation5], 4
      %s43 = int_to_ptr.vmem [resolvable:$true] %s42
      %48 = dma.hbm_to_vmem [thread:$0]  %s5, 512, %s43, [#allocation6], 128, 128, 8
    $region25: #{neural_net_forward.1} parent=1 // pred_fallthru
      _
    // Predicated region
    $region26: #{neural_net_forward.1} parent=1 // pred_check
      _
    $region27: #{neural_net_forward.1} parent=1 // pred_check_branch
      %50 = sbr.rel (0) target = $region29
    $region28: #{neural_net_forward.1} parent=1 // pred_region
      _
    $region29: #{neural_net_forward.1} parent=1 // pred_fallthru
      _
    // Predicated region
    $region30: #{neural_net_forward.1} parent=1 // pred_check
      _
    $region31: #{neural_net_forward.1} parent=1 // pred_check_branch
      %52 = sbr.rel (0) target = $region33
    $region32: #{neural_net_forward.1} parent=1 // pred_region
      _
    $region33: #{neural_net_forward.1} parent=1 // pred_fallthru
      _
    // Predicated region
    $region34: #{neural_net_forward.1} parent=1 // pred_check
      _
    $region35: #{neural_net_forward.1} parent=1 // pred_check_branch
      %54 = sbr.rel (0) target = $region37
    $region36: #{neural_net_forward.1} parent=1 // pred_region
      _
    $region37: #{neural_net_forward.1} parent=1 // pred_fallthru
      _
    // Predicated region
    $region38: #{neural_net_forward.1} parent=1 // pred_check
      _
    $region39: #{neural_net_forward.1} parent=1 // pred_check_branch
      %56 = sbr.rel (0) target = $region41
    $region40: #{neural_net_forward.1} parent=1 // pred_region
      %57 = dma.done [#allocation3], 256
    $region41: #{neural_net_forward.1} parent=1 // pred_fallthru
      _
    // Predicated region
    $region42: #{neural_net_forward.1} parent=1 // pred_check
      _
    $region43: #{neural_net_forward.1} parent=1 // pred_check_branch
      %59 = sbr.rel (0) target = $region45
    $region44: #{neural_net_forward.1} parent=1 // pred_region
      %60 = dma.done [#allocation6], 512
    $region45: #{neural_net_forward.1} parent=1 // pred_fallthru
      _
    %v61 = vld [vmem:[%s0] sm:$0xff]
    %v62 = vld [vmem:[#allocation2] sm:$0xff]
    %v63 = vld [vmem:[#allocation2 + $0x8] sm:$0xff]
    %v64 = vld [vmem:[%s2] sm:$0x1]
    %v66 = vlaneseq
    %v67 = vshrl.u32 %v66, 7
    %v68 = vsub.s32 0, %v67
    %v69 = vrot.slane %v64, %v68
    %vm71 = vcmask 130048
    %v73 = vsel %vm71, %v61, 0
    %75 = vmatprep.subr.mxu0 0.0
    %76 = vmatpush1.msra.mxu0 0.0
    %77 = vmatprep.subr.mxu0 0.0
    %78 = vmatpush1.msra.mxu0 0.0
    %79 = vmatprep.subr.mxu0 0.0
    %80 = vmatpush1.msra.mxu0 0.0
    %81 = vmatprep.subr.mxu0 0.0
    %82 = vmatpush1.msra.mxu0 0.0
    %83 = vmatprep.subr.mxu0 0.0
    %84 = vmatpush1.msra.mxu0 0.0
    %85 = vmatprep.subr.mxu0 0.0
    %86 = vmatpush1.msra.mxu0 0.0
    %87 = vmatprep.subr.mxu0 0.0
    %88 = vmatpush1.msra.mxu0 0.0
    %89 = vmatprep.subr.mxu0 0.0
    %90 = vmatpush1.msra.mxu0 0.0
    %91 = vmatprep.subr.mxu0 0.0
    %92 = vmatpush1.msra.mxu0 0.0
    %93 = vmatprep.subr.mxu0 0.0
    %94 = vmatpush1.msra.mxu0 0.0
    %95 = vmatprep.subr.mxu0 0.0
    %96 = vmatpush1.msra.mxu0 0.0
    %97 = vmatprep.subr.mxu0 0.0
    %98 = vmatpush1.msra.mxu0 0.0
    %99 = vmatprep.subr.mxu0 0.0
    %100 = vmatpush1.msra.mxu0 0.0
    %101 = vmatprep.subr.mxu0 0.0
    %102 = vmatpush1.msra.mxu0 0.0
    %103 = vmatprep.subr.mxu0 0.0
    %104 = vmatpush1.msra.mxu0 %v63
    %105 = vmatprep.subr.mxu0 0.0
    %106 = vmatpush1.msra.mxu0 %v62
    %107 = vmatprep.subr.mxu0 0.0
    %108 = vmatpush2.msra.mxu0 0.0
    %109 = vmatprep.subr.mxu0 0.0
    %110 = vmatpush2.msra.mxu0 0.0
    %111 = vmatprep.subr.mxu0 0.0
    %112 = vmatpush2.msra.mxu0 0.0
    %113 = vmatprep.subr.mxu0 0.0
    %114 = vmatpush2.msra.mxu0 0.0
    %115 = vmatprep.subr.mxu0 0.0
    %116 = vmatpush2.msra.mxu0 0.0
    %117 = vmatprep.subr.mxu0 0.0
    %118 = vmatpush2.msra.mxu0 0.0
    %119 = vmatprep.subr.mxu0 0.0
    %120 = vmatpush2.msra.mxu0 0.0
    %121 = vmatprep.subr.mxu0 0.0
    %122 = vmatpush2.msra.mxu0 0.0
    %123 = vmatprep.subr.mxu0 0.0
    %124 = vmatpush2.msra.mxu0 0.0
    %125 = vmatprep.subr.mxu0 0.0
    %126 = vmatpush2.msra.mxu0 0.0
    %127 = vmatprep.subr.mxu0 0.0
    %128 = vmatpush2.msra.mxu0 0.0
    %129 = vmatprep.subr.mxu0 0.0
    %130 = vmatpush2.msra.mxu0 0.0
    %131 = vmatprep.subr.mxu0 0.0
    %132 = vmatpush2.msra.mxu0 0.0
    %133 = vmatprep.subr.mxu0 0.0
    %134 = vmatpush2.msra.mxu0 0.0
    %135 = vmatprep.subr.mxu0 0.0
    %136 = vmatpush2.msra.mxu0 0.0
    %137 = vmatprep.subr.mxu0 0.0
    %138 = vmatpush2.msra.mxu0 0.0
    %139 = vmatprep.mubr.f32.mxu0 0.0
    %140 = vmatmul.mubr.f32.gmra.mxu0 %v73
    %v141 = vpop.f32.mrf.mxu0
    %v142 = vadd.f32 %v69, %v141
    %v143 = vpop.f32.mrf.mxu0
    %144 = vdwg.mxu0
    %vm145 = vcmask 261120
    %v146 = vsel %vm145, %v142, -inf
    %147 = vmax.xlane.f32.xlu0 %v146
    %v148 = vpop.xlane.xlu0 %147
    %v149 = vsub.f32 %v142, %v148
    %v150 = vmul.f32 %v149, 1.442695
    %v151 = vpow.pop %v150
    %v152 = vsel %vm145, %v151, 0.0
    %153 = vadd.xlane.f32.xlu0 %v152
    %v154 = vpop.xlane.xlu0 %153
    %v155 = vrcp.pop %v154
    %v156 = vmul.f32 %v151, %v155
    %v157 = vld [vmem:[%s3] sm:$0xff]
    %v158 = vld [vmem:[%s3 + $0x8] sm:$0xff]
    %v159 = vld [vmem:[%s3 + $0x10] sm:$0xff]
    %v160 = vld [vmem:[%s3 + $0x18] sm:$0xff]
    %v161 = vld [vmem:[%s4] sm:$0x1]
    %v163 = vlaneseq
    %v164 = vshrl.u32 %v163, 7
    %v165 = vsub.s32 0, %v164
    %v166 = vrot.slane %v161, %v165
    %v169 = vsel %vm145, %v156, 0
    %171 = vmatprep.subr.mxu0 0.0
    %172 = vmatpush1.msra.mxu0 0.0
    %173 = vmatprep.subr.mxu0 0.0
    %174 = vmatpush1.msra.mxu0 0.0
    %175 = vmatprep.subr.mxu0 0.0
    %176 = vmatpush1.msra.mxu0 0.0
    %177 = vmatprep.subr.mxu0 0.0
    %178 = vmatpush1.msra.mxu0 0.0
    %179 = vmatprep.subr.mxu0 0.0
    %180 = vmatpush1.msra.mxu0 0.0
    %181 = vmatprep.subr.mxu0 0.0
    %182 = vmatpush1.msra.mxu0 0.0
    %183 = vmatprep.subr.mxu0 0.0
    %184 = vmatpush1.msra.mxu0 0.0
    %185 = vmatprep.subr.mxu0 0.0
    %186 = vmatpush1.msra.mxu0 0.0
    %187 = vmatprep.subr.mxu0 0.0
    %188 = vmatpush1.msra.mxu0 0.0
    %189 = vmatprep.subr.mxu0 0.0
    %190 = vmatpush1.msra.mxu0 0.0
    %191 = vmatprep.subr.mxu0 0.0
    %192 = vmatpush1.msra.mxu0 0.0
    %193 = vmatprep.subr.mxu0 0.0
    %194 = vmatpush1.msra.mxu0 0.0
    %195 = vmatprep.subr.mxu0 0.0
    %196 = vmatpush1.msra.mxu0 %v160
    %197 = vmatprep.subr.mxu0 0.0
    %198 = vmatpush1.msra.mxu0 %v159
    %199 = vmatprep.subr.mxu0 0.0
    %200 = vmatpush1.msra.mxu0 %v158
    %201 = vmatprep.subr.mxu0 0.0
    %202 = vmatpush1.msra.mxu0 %v157
    %203 = vmatprep.subr.mxu0 0.0
    %204 = vmatpush2.msra.mxu0 0.0
    %205 = vmatprep.subr.mxu0 0.0
    %206 = vmatpush2.msra.mxu0 0.0
    %207 = vmatprep.subr.mxu0 0.0
    %208 = vmatpush2.msra.mxu0 0.0
    %209 = vmatprep.subr.mxu0 0.0
    %210 = vmatpush2.msra.mxu0 0.0
    %211 = vmatprep.subr.mxu0 0.0
    %212 = vmatpush2.msra.mxu0 0.0
    %213 = vmatprep.subr.mxu0 0.0
    %214 = vmatpush2.msra.mxu0 0.0
    %215 = vmatprep.subr.mxu0 0.0
    %216 = vmatpush2.msra.mxu0 0.0
    %217 = vmatprep.subr.mxu0 0.0
    %218 = vmatpush2.msra.mxu0 0.0
    %219 = vmatprep.subr.mxu0 0.0
    %220 = vmatpush2.msra.mxu0 0.0
    %221 = vmatprep.subr.mxu0 0.0
    %222 = vmatpush2.msra.mxu0 0.0
    %223 = vmatprep.subr.mxu0 0.0
    %224 = vmatpush2.msra.mxu0 0.0
    %225 = vmatprep.subr.mxu0 0.0
    %226 = vmatpush2.msra.mxu0 0.0
    %227 = vmatprep.subr.mxu0 0.0
    %228 = vmatpush2.msra.mxu0 0.0
    %229 = vmatprep.subr.mxu0 0.0
    %230 = vmatpush2.msra.mxu0 0.0
    %231 = vmatprep.subr.mxu0 0.0
    %232 = vmatpush2.msra.mxu0 0.0
    %233 = vmatprep.subr.mxu0 0.0
    %234 = vmatpush2.msra.mxu0 0.0
    %235 = vmatprep.mubr.f32.mxu0 0.0
    %236 = vmatmul.mubr.f32.gmra.mxu0 %v169
    %v237 = vpop.f32.mrf.mxu0
    %v238 = vadd.f32 %v166, %v237
    %v239 = vpop.f32.mrf.mxu0
    %240 = vdwg.mxu0
    %v241 = vsel %vm145, %v238, -inf
    %242 = vmax.xlane.f32.xlu0 %v241
    %v243 = vpop.xlane.xlu0 %242
    %v244 = vsub.f32 %v238, %v243
    %v245 = vmul.f32 %v244, 1.442695
    %v246 = vpow.pop %v245
    %v247 = vsel %vm145, %v246, 0.0
    %248 = vadd.xlane.f32.xlu0 %v247
    %v249 = vpop.xlane.xlu0 %248
    %v250 = vrcp.pop %v249
    %v251 = vmul.f32 %v246, %v250
    %v252 = vld [vmem:[#allocation5] sm:$0xff]
    %v253 = vld [vmem:[#allocation5 + $0x8] sm:$0xff]
    %v254 = vld [vmem:[#allocation5 + $0x10] sm:$0xff]
    %v255 = vld [vmem:[#allocation5 + $0x18] sm:$0xff]
    %v256 = vld [vmem:[%s6] sm:$0x1]
    %v258 = vlaneseq
    %v259 = vshrl.u32 %v258, 7
    %v260 = vsub.s32 0, %v259
    %v261 = vrot.slane %v256, %v260
    %v264 = vsel %vm145, %v251, 0
    %266 = vmatprep.subr.mxu0 0.0
    %267 = vmatpush1.msra.mxu0 0.0
    %268 = vmatprep.subr.mxu0 0.0
    %269 = vmatpush1.msra.mxu0 0.0
    %270 = vmatprep.subr.mxu0 0.0
    %271 = vmatpush1.msra.mxu0 0.0
    %272 = vmatprep.subr.mxu0 0.0
    %273 = vmatpush1.msra.mxu0 0.0
    %274 = vmatprep.subr.mxu0 0.0
    %275 = vmatpush1.msra.mxu0 0.0
    %276 = vmatprep.subr.mxu0 0.0
    %277 = vmatpush1.msra.mxu0 0.0
    %278 = vmatprep.subr.mxu0 0.0
    %279 = vmatpush1.msra.mxu0 0.0
    %280 = vmatprep.subr.mxu0 0.0
    %281 = vmatpush1.msra.mxu0 0.0
    %282 = vmatprep.subr.mxu0 0.0
    %283 = vmatpush1.msra.mxu0 0.0
    %284 = vmatprep.subr.mxu0 0.0
    %285 = vmatpush1.msra.mxu0 0.0
    %286 = vmatprep.subr.mxu0 0.0
    %287 = vmatpush1.msra.mxu0 0.0
    %288 = vmatprep.subr.mxu0 0.0
    %289 = vmatpush1.msra.mxu0 0.0
    %290 = vmatprep.subr.mxu0 0.0
    %291 = vmatpush1.msra.mxu0 %v255
    %292 = vmatprep.subr.mxu0 0.0
    %293 = vmatpush1.msra.mxu0 %v254
    %294 = vmatprep.subr.mxu0 0.0
    %295 = vmatpush1.msra.mxu0 %v253
    %296 = vmatprep.subr.mxu0 0.0
    %297 = vmatpush1.msra.mxu0 %v252
    %298 = vmatprep.subr.mxu0 0.0
    %299 = vmatpush2.msra.mxu0 0.0
    %300 = vmatprep.subr.mxu0 0.0
    %301 = vmatpush2.msra.mxu0 0.0
    %302 = vmatprep.subr.mxu0 0.0
    %303 = vmatpush2.msra.mxu0 0.0
    %304 = vmatprep.subr.mxu0 0.0
    %305 = vmatpush2.msra.mxu0 0.0
    %306 = vmatprep.subr.mxu0 0.0
    %307 = vmatpush2.msra.mxu0 0.0
    %308 = vmatprep.subr.mxu0 0.0
    %309 = vmatpush2.msra.mxu0 0.0
    %310 = vmatprep.subr.mxu0 0.0
    %311 = vmatpush2.msra.mxu0 0.0
    %312 = vmatprep.subr.mxu0 0.0
    %313 = vmatpush2.msra.mxu0 0.0
    %314 = vmatprep.subr.mxu0 0.0
    %315 = vmatpush2.msra.mxu0 0.0
    %316 = vmatprep.subr.mxu0 0.0
    %317 = vmatpush2.msra.mxu0 0.0
    %318 = vmatprep.subr.mxu0 0.0
    %319 = vmatpush2.msra.mxu0 0.0
    %320 = vmatprep.subr.mxu0 0.0
    %321 = vmatpush2.msra.mxu0 0.0
    %322 = vmatprep.subr.mxu0 0.0
    %323 = vmatpush2.msra.mxu0 0.0
    %324 = vmatprep.subr.mxu0 0.0
    %325 = vmatpush2.msra.mxu0 0.0
    %326 = vmatprep.subr.mxu0 0.0
    %327 = vmatpush2.msra.mxu0 0.0
    %328 = vmatprep.subr.mxu0 0.0
    %329 = vmatpush2.msra.mxu0 0.0
    %330 = vmatprep.mubr.f32.mxu0 0.0
    %331 = vmatmul.mubr.f32.gmra.mxu0 %v264
    %v332 = vpop.f32.mrf.mxu0
    %v333 = vadd.f32 %v261, %v332
    %v334 = vpop.f32.mrf.mxu0
    %335 = vdwg.mxu0
    %v336 = vsel %vm145, %v333, -inf
    %337 = vmax.xlane.f32.xlu0 %v336
    %v338 = vpop.xlane.xlu0 %337
    %v339 = vsub.f32 %v333, %v338
    %v340 = vmul.f32 %v339, 1.442695
    %v341 = vpow.pop %v340
    %v342 = vsel %vm145, %v341, 0.0
    %343 = vadd.xlane.f32.xlu0 %v342
    %v344 = vpop.xlane.xlu0 %343
    %v345 = vrcp.pop %v344
    %v346 = vmul.f32 %v341, %v345
    %v347 = vld [vmem:[%s7] sm:$0xff]
    %v348 = vld [vmem:[%s7 + $0x8] sm:$0xff]
    %v349 = vld [vmem:[%s7 + $0x10] sm:$0xff]
    %v350 = vld [vmem:[%s7 + $0x18] sm:$0xff]
    %v351 = vld [vmem:[%s8] sm:$0x1]
    %v353 = vlaneseq
    %v354 = vshrl.u32 %v353, 7
    %v355 = vsub.s32 0, %v354
    %v356 = vrot.slane %v351, %v355
    %v359 = vsel %vm145, %v346, 0
    %361 = vmatprep.subr.mxu0 0.0
    %362 = vmatpush1.msra.mxu0 0.0
    %363 = vmatprep.subr.mxu0 0.0
    %364 = vmatpush1.msra.mxu0 0.0
    %365 = vmatprep.subr.mxu0 0.0
    %366 = vmatpush1.msra.mxu0 0.0
    %367 = vmatprep.subr.mxu0 0.0
    %368 = vmatpush1.msra.mxu0 0.0
    %369 = vmatprep.subr.mxu0 0.0
    %370 = vmatpush1.msra.mxu0 0.0
    %371 = vmatprep.subr.mxu0 0.0
    %372 = vmatpush1.msra.mxu0 0.0
    %373 = vmatprep.subr.mxu0 0.0
    %374 = vmatpush1.msra.mxu0 0.0
    %375 = vmatprep.subr.mxu0 0.0
    %376 = vmatpush1.msra.mxu0 0.0
    %377 = vmatprep.subr.mxu0 0.0
    %378 = vmatpush1.msra.mxu0 0.0
    %379 = vmatprep.subr.mxu0 0.0
    %380 = vmatpush1.msra.mxu0 0.0
    %381 = vmatprep.subr.mxu0 0.0
    %382 = vmatpush1.msra.mxu0 0.0
    %383 = vmatprep.subr.mxu0 0.0
    %384 = vmatpush1.msra.mxu0 0.0
    %385 = vmatprep.subr.mxu0 0.0
    %386 = vmatpush1.msra.mxu0 %v350
    %387 = vmatprep.subr.mxu0 0.0
    %388 = vmatpush1.msra.mxu0 %v349
    %389 = vmatprep.subr.mxu0 0.0
    %390 = vmatpush1.msra.mxu0 %v348
    %391 = vmatprep.subr.mxu0 0.0
    %392 = vmatpush1.msra.mxu0 %v347
    %393 = vmatprep.subr.mxu0 0.0
    %394 = vmatpush2.msra.mxu0 0.0
    %395 = vmatprep.subr.mxu0 0.0
    %396 = vmatpush2.msra.mxu0 0.0
    %397 = vmatprep.subr.mxu0 0.0
    %398 = vmatpush2.msra.mxu0 0.0
    %399 = vmatprep.subr.mxu0 0.0
    %400 = vmatpush2.msra.mxu0 0.0
    %401 = vmatprep.subr.mxu0 0.0
    %402 = vmatpush2.msra.mxu0 0.0
    %403 = vmatprep.subr.mxu0 0.0
    %404 = vmatpush2.msra.mxu0 0.0
    %405 = vmatprep.subr.mxu0 0.0
    %406 = vmatpush2.msra.mxu0 0.0
    %407 = vmatprep.subr.mxu0 0.0
    %408 = vmatpush2.msra.mxu0 0.0
    %409 = vmatprep.subr.mxu0 0.0
    %410 = vmatpush2.msra.mxu0 0.0
    %411 = vmatprep.subr.mxu0 0.0
    %412 = vmatpush2.msra.mxu0 0.0
    %413 = vmatprep.subr.mxu0 0.0
    %414 = vmatpush2.msra.mxu0 0.0
    %415 = vmatprep.subr.mxu0 0.0
    %416 = vmatpush2.msra.mxu0 0.0
    %417 = vmatprep.subr.mxu0 0.0
    %418 = vmatpush2.msra.mxu0 0.0
    %419 = vmatprep.subr.mxu0 0.0
    %420 = vmatpush2.msra.mxu0 0.0
    %421 = vmatprep.subr.mxu0 0.0
    %422 = vmatpush2.msra.mxu0 0.0
    %423 = vmatprep.subr.mxu0 0.0
    %424 = vmatpush2.msra.mxu0 0.0
    %425 = vmatprep.mubr.f32.mxu0 0.0
    %426 = vmatmul.mubr.f32.gmra.mxu0 %v359
    %v427 = vpop.f32.mrf.mxu0
    %v428 = vadd.f32 %v356, %v427
    %v429 = vpop.f32.mrf.mxu0
    %430 = vdwg.mxu0
    %vm431 = vcmask 64512
    %v432 = vsel %vm431, %v428, -inf
    %433 = vmax.xlane.f32.xlu0 %v432
    %v434 = vpop.xlane.xlu0 %433
    %v435 = vsub.f32 %v428, %v434
    %v436 = vmul.f32 %v435, 1.442695
    %v437 = vpow.pop %v436
    %v438 = vsel %vm431, %v437, 0.0
    %439 = vadd.xlane.f32.xlu0 %v438
    %v440 = vpop.xlane.xlu0 %439
    %v441 = vrcp.pop %v440
    %v442 = vmul.f32 %v437, %v441
    %443 = vst.msk [vmem:[#allocation7] sm:$0xff] %vm431, %v442
    // Predicated region
    $region46: #{neural_net_forward.1} parent=1 // pred_check
      _
    $region47: #{neural_net_forward.1} parent=1 // pred_check_branch
      %445 = sbr.rel (0) target = $region49
    $region48: #{neural_net_forward.1} parent=1 // pred_region
      %s447 = ssub.s32 128, 32
      %448 = vsyncadd [#allocation4], %s447
      %s449 = sshll.u32 [#allocation7], 4
      %s450 = int_to_ptr.vmem [resolvable:$true] %s449
      %455 = dma.vmem_to_hbm [thread:$0]  %s450, 32, %s9, [#allocation4], 32, 32, 2
    $region49: #{neural_net_forward.1} parent=1 // pred_fallthru
      _
    // Predicated region
    $region50: #{neural_net_forward.1} parent=1 // pred_check
      _
    $region51: #{neural_net_forward.1} parent=1 // pred_check_branch
      %457 = sbr.rel (0) target = $region53
    $region52: #{neural_net_forward.1} parent=1 // pred_region
      %458 = dma.done [#allocation4], 128
    $region53: #{neural_net_forward.1} parent=1 // pred_fallthru
      _
    %459 = vsyncpa [#allocation3], 1
    %460 = vsyncpa [#allocation6], 1
    %461 = vsyncpa [#allocation4], 1

</llo_original>
